<compile_context>
chip_gen: v7x
topology: tpu7x:2x2x1
jax: 0.10.0
libtpu: 0.0.40
codegen_flags: <defaults>
</compile_context>

<pallas_src>
import functools

import jax
import jax.numpy as jnp
from jax.experimental import pallas as pl
from jax.experimental.pallas import tpu as pltpu


def _round_up(x: int, m: int) -> int:
    return (x + m - 1) // m * m


def _pick_batch_tile(b8: int, max_tile: int = 512) -> int:
    """Largest multiple of 8 that divides b8, <= max_tile, and (when b8 >= 16)
    gives at least 2 grid tiles so v7x's two TensorCores both get work."""
    cap = min(max_tile, b8)
    if b8 >= 16:
        cap = min(cap, max(8, (b8 // 2) // 8 * 8))
    cap = max(cap, 8)
    best = 8
    t = 8
    while t <= cap:
        if b8 % t == 0:
            best = t
        t += 8
    return best


def _fused_mlp_kernel(*refs, num_layers: int):
    """refs = (x_ref, w0, b0, w1, b1, ..., w_{L-1}, b_{L-1}, o_ref)."""
    x_ref = refs[0]
    o_ref = refs[-1]
    layer_refs = refs[1:-1]

    h = x_ref[...]                                    # (tile, Din_p) f32
    for i in range(num_layers):
        w_ref = layer_refs[2 * i]                     # (Din_p, Dout_p) bf16
        b_ref = layer_refs[2 * i + 1]                 # (1, Dout_p)     f32
        # bf16 MXU inputs, f32 accumulation.
        acc = jnp.dot(h.astype(jnp.bfloat16), w_ref[...],
                      preferred_element_type=jnp.float32)
        acc = acc + b_ref[...]                        # f32 epilogue on VPU
        if i < num_layers - 1:
            h = jnp.maximum(acc, 0.0)                 # ReLU on hidden layers
        else:
            h = acc
    o_ref[...] = h.astype(o_ref.dtype)                # one lane-dense store/tile


def mlp_forward(x, params, *, batch_tile=None, single_buffer_weights=True):
    """Fused MLP forward.  x: (B, Din); params: list of (W:(Din,Dout), b:(1,Dout))."""
    B, Din = x.shape
    n_layers = len(params)
    dims = [Din] + [w.shape[1] for (w, _) in params]

    # Pad feature dims to lane multiples (128), batch to sublane multiples (8).
    dims_p = [_round_up(d, 128) for d in dims]
    B8 = _round_up(B, 8)
    if batch_tile is None:
        batch_tile = _pick_batch_tile(B8)
    B_p = _round_up(B8, batch_tile)

    x_p = jnp.zeros((B_p, dims_p[0]), x.dtype).at[:B, :Din].set(x)

    def weight_spec(block_shape):
        # Grid-invariant block: single-buffer it if the JAX version supports it.
        if single_buffer_weights:
            return pl.BlockSpec(block_shape, lambda i: (0, 0),
                                pipeline_mode=pl.Buffered(1))
        return pl.BlockSpec(block_shape, lambda i: (0, 0))

    padded_params = []
    in_specs = [pl.BlockSpec((batch_tile, dims_p[0]), lambda i: (i, 0))]
    weight_bytes = 0
    for li, (w, b) in enumerate(params):
        din, dout = w.shape
        din_p, dout_p = dims_p[li], dims_p[li + 1]
        # Weights in bf16 (MXU-native), biases kept f32 for the f32 epilogue.
        w_p = (jnp.zeros((din_p, dout_p), jnp.bfloat16)
               .at[:din, :dout].set(w.astype(jnp.bfloat16)))
        b_p = jnp.zeros((1, dout_p), jnp.float32).at[:, :dout].set(
            b.astype(jnp.float32))
        padded_params += [w_p, b_p]
        in_specs.append(weight_spec((din_p, dout_p)))
        in_specs.append(weight_spec((1, dout_p)))
        weight_bytes += din_p * dout_p * 2 + dout_p * 4

    # ---- explicit VMEM budget -------------------------------------------
    buf_factor = 1 if single_buffer_weights else 2
    dmax = max(dims_p)
    io_bytes = 2 * batch_tile * dims_p[0] * 4 + 2 * batch_tile * dims_p[-1] * 4
    h_bytes = batch_tile * dmax * 4 + batch_tile * dmax * 2   # f32 h + bf16 cast copy
    budget = buf_factor * weight_bytes + io_bytes + h_bytes
    if budget > (48 << 20):
        # TODO(synk): add a K/N-tiled (grid reduction axis + f32 accumulator)
        # fallback for MLPs whose resident weights exceed ~48 MiB (v7x VMEM).
        raise ValueError(
            f"MLP too large for the weight-resident fused kernel "
            f"(estimated VMEM {budget >> 20} MiB > 48 MiB).")
    vmem_limit = int(min(max(int(budget * 1.5) + (2 << 20), 16 << 20), 64 << 20))

    out_specs = pl.BlockSpec((batch_tile, dims_p[-1]), lambda i: (i, 0))
    kernel = functools.partial(_fused_mlp_kernel, num_layers=n_layers)

    out_p = pl.pallas_call(
        kernel,
        out_shape=jax.ShapeDtypeStruct((B_p, dims_p[-1]), x.dtype),
        grid=(B_p // batch_tile,),
        in_specs=in_specs,
        out_specs=out_specs,
        compiler_params=pltpu.CompilerParams(
            dimension_semantics=("parallel",),      # batch tiles shard across TCs
            vmem_limit_bytes=vmem_limit),
    )(x_p, *padded_params)

    return out_p[:B, :dims[-1]]


def init_mlp_params(key, input_dim, hidden_sizes, output_dim, dtype=jnp.float32):
    """Deterministic init mimicking nn.Linear's U(-1/sqrt(fan_in), 1/sqrt(fan_in))."""
    dims = [input_dim] + list(hidden_sizes) + [output_dim]
    params = []
    for din, dout in zip(dims[:-1], dims[1:]):
        key, kw, kb = jax.random.split(key, 3)
        bound = 1.0 / (din ** 0.5)
        w = jax.random.uniform(kw, (din, dout), dtype, minval=-bound, maxval=bound)
        b = jax.random.uniform(kb, (1, dout), dtype, minval=-bound, maxval=bound)
        params.append((w, b))
    return params


def mlp_reference_f32(x, params):
    n = len(params)
    h = x
    for i, (w, b) in enumerate(params):
        h = h @ w + b
        if i < n - 1:
            h = jnp.maximum(h, 0.0)
    return h


def mlp_reference_bf16(x, params):
    """Reference matching the kernel's numerics (bf16 MXU inputs, f32 accum)."""
    n = len(params)
    h = x
    for i, (w, b) in enumerate(params):
        h = jnp.dot(h.astype(jnp.bfloat16), w.astype(jnp.bfloat16),
                    preferred_element_type=jnp.float32) + b
        if i < n - 1:
            h = jnp.maximum(h, 0.0)
    return h


if __name__ == "__main__":
    key = jax.random.PRNGKey(0)
    kx, kp = jax.random.split(key)

    batch = 2
    input_dim = 16
    hidden_sizes = [32, 32]
    output_dim = 8

    x = jax.random.normal(kx, (batch, input_dim), jnp.float32)
    params = init_mlp_params(kp, input_dim, hidden_sizes, output_dim)

    try:
        fwd = jax.jit(functools.partial(mlp_forward, single_buffer_weights=True))
        out = jax.block_until_ready(fwd(x, params))
    except Exception:
        # Fallback if pipeline_mode=pl.Buffered(1) is unsupported in this JAX.
        fwd = jax.jit(functools.partial(mlp_forward, single_buffer_weights=False))
        out = jax.block_until_ready(fwd(x, params))

    ref32 = jax.block_until_ready(mlp_reference_f32(x, params))
    ref16 = jax.block_until_ready(mlp_reference_bf16(x, params))

    assert out.shape == (batch, output_dim), out.shape
    # bf16-MXU numerics: loose tolerance vs the pure-f32 reference,
    # tight tolerance vs the bf16-matched reference.
    assert jnp.allclose(out, ref32, rtol=3e-2, atol=3e-2), "mismatch vs f32 reference"
    assert jnp.allclose(out, ref16, rtol=2e-3, atol=2e-3), "mismatch vs bf16 reference"
    print("KERNEL_OK")
</pallas_src>

<mosaic_0001>
module attributes {stable_mosaic.version = 11 : i64} {
  func.func @_fused_mlp_kernel(%arg0: i32, %arg1: memref<8x128xf32, #tpu.memory_space<vmem>>, %arg2: memref<128x128xbf16, #tpu.memory_space<vmem>>, %arg3: memref<1x128xf32, #tpu.memory_space<vmem>>, %arg4: memref<128x128xbf16, #tpu.memory_space<vmem>>, %arg5: memref<1x128xf32, #tpu.memory_space<vmem>>, %arg6: memref<128x128xbf16, #tpu.memory_space<vmem>>, %arg7: memref<1x128xf32, #tpu.memory_space<vmem>>, %arg8: memref<8x128xf32, #tpu.memory_space<vmem>>) attributes {dimension_semantics = [#tpu.dimension_semantics<parallel>], iteration_bounds = array<i64: 1>, scalar_prefetch = 0 : i64, scratch_operands = 0 : i64, tpu.core_type = #tpu.core_type<tc>, window_params = [{transform_indices = @transform_0, window_bounds = array<i64: 8, 128>}, {pipeline_mode = #tpu.pipeline_mode<synchronous>, transform_indices = @transform_1, window_bounds = array<i64: 128, 128>}, {pipeline_mode = #tpu.pipeline_mode<synchronous>, transform_indices = @transform_2, window_bounds = array<i64: 1, 128>}, {pipeline_mode = #tpu.pipeline_mode<synchronous>, transform_indices = @transform_3, window_bounds = array<i64: 128, 128>}, {pipeline_mode = #tpu.pipeline_mode<synchronous>, transform_indices = @transform_4, window_bounds = array<i64: 1, 128>}, {pipeline_mode = #tpu.pipeline_mode<synchronous>, transform_indices = @transform_5, window_bounds = array<i64: 128, 128>}, {pipeline_mode = #tpu.pipeline_mode<synchronous>, transform_indices = @transform_6, window_bounds = array<i64: 1, 128>}, {transform_indices = @transform_7, window_bounds = array<i64: 8, 128>}]} {
    %c0 = arith.constant 0 : index
    %c0_0 = arith.constant 0 : index
    %0 = vector.load %arg1[%c0, %c0_0] : memref<8x128xf32, #tpu.memory_space<vmem>>, vector<8x128xf32>
    %1 = arith.truncf %0 : vector<8x128xf32> to vector<8x128xbf16>
    %c0_1 = arith.constant 0 : index
    %c0_2 = arith.constant 0 : index
    %2 = vector.load %arg2[%c0_1, %c0_2] : memref<128x128xbf16, #tpu.memory_space<vmem>>, vector<128x128xbf16>
    %cst = arith.constant dense<0.000000e+00> : vector<8x128xf32>
    %3 = tpu.matmul %1, %2, %cst {dimension_numbers = #tpu.dot_dimension_numbers<[1], [0], [0], [1], [0, 0, 1, 1], [], []>} : vector<8x128xbf16>, vector<128x128xbf16>, vector<8x128xf32> -> vector<8x128xf32>
    %c0_3 = arith.constant 0 : index
    %c0_4 = arith.constant 0 : index
    %4 = vector.load %arg3[%c0_3, %c0_4] : memref<1x128xf32, #tpu.memory_space<vmem>>, vector<1x128xf32>
    %5 = vector.broadcast %4 : vector<1x128xf32> to vector<8x128xf32>
    %6 = arith.addf %3, %5 : vector<8x128xf32>
    %cst_5 = arith.constant 0.000000e+00 : f32
    %7 = vector.broadcast %cst_5 : f32 to vector<8x128xf32>
    %8 = arith.maximumf %6, %7 : vector<8x128xf32>
    %9 = arith.truncf %8 : vector<8x128xf32> to vector<8x128xbf16>
    %c0_6 = arith.constant 0 : index
    %c0_7 = arith.constant 0 : index
    %10 = vector.load %arg4[%c0_6, %c0_7] : memref<128x128xbf16, #tpu.memory_space<vmem>>, vector<128x128xbf16>
    %cst_8 = arith.constant dense<0.000000e+00> : vector<8x128xf32>
    %11 = tpu.matmul %9, %10, %cst_8 {dimension_numbers = #tpu.dot_dimension_numbers<[1], [0], [0], [1], [0, 0, 1, 1], [], []>} : vector<8x128xbf16>, vector<128x128xbf16>, vector<8x128xf32> -> vector<8x128xf32>
    %c0_9 = arith.constant 0 : index
    %c0_10 = arith.constant 0 : index
    %12 = vector.load %arg5[%c0_9, %c0_10] : memref<1x128xf32, #tpu.memory_space<vmem>>, vector<1x128xf32>
    %13 = vector.broadcast %12 : vector<1x128xf32> to vector<8x128xf32>
    %14 = arith.addf %11, %13 : vector<8x128xf32>
    %cst_11 = arith.constant 0.000000e+00 : f32
    %15 = vector.broadcast %cst_11 : f32 to vector<8x128xf32>
    %16 = arith.maximumf %14, %15 : vector<8x128xf32>
    %17 = arith.truncf %16 : vector<8x128xf32> to vector<8x128xbf16>
    %c0_12 = arith.constant 0 : index
    %c0_13 = arith.constant 0 : index
    %18 = vector.load %arg6[%c0_12, %c0_13] : memref<128x128xbf16, #tpu.memory_space<vmem>>, vector<128x128xbf16>
    %cst_14 = arith.constant dense<0.000000e+00> : vector<8x128xf32>
    %19 = tpu.matmul %17, %18, %cst_14 {dimension_numbers = #tpu.dot_dimension_numbers<[1], [0], [0], [1], [0, 0, 1, 1], [], []>} : vector<8x128xbf16>, vector<128x128xbf16>, vector<8x128xf32> -> vector<8x128xf32>
    %c0_15 = arith.constant 0 : index
    %c0_16 = arith.constant 0 : index
    %20 = vector.load %arg7[%c0_15, %c0_16] : memref<1x128xf32, #tpu.memory_space<vmem>>, vector<1x128xf32>
    %21 = vector.broadcast %20 : vector<1x128xf32> to vector<8x128xf32>
    %22 = arith.addf %19, %21 : vector<8x128xf32>
    %c0_17 = arith.constant 0 : index
    %c0_18 = arith.constant 0 : index
    %23 = vector.load %arg8[%c0_17, %c0_18] : memref<8x128xf32, #tpu.memory_space<vmem>>, vector<8x128xf32>
    tpu.vector_store %arg8[%c0_17, %c0_18], %22 {strides = array<i32>} : memref<8x128xf32, #tpu.memory_space<vmem>>, vector<8x128xf32>,
    return
  }
  func.func @transform_0(%arg0: i32) -> (i32, i32) {
    %c0_i32 = arith.constant 0 : i32
    %c0_i32_0 = arith.constant 0 : i32
    return %arg0, %c0_i32 : i32, i32
  }
  func.func @transform_1(%arg0: i32) -> (i32, i32) {
    %c0_i32 = arith.constant 0 : i32
    %c0_i32_0 = arith.constant 0 : i32
    %c0_i32_1 = arith.constant 0 : i32
    return %c0_i32, %c0_i32_0 : i32, i32
  }
  func.func @transform_2(%arg0: i32) -> (i32, i32) {
    %c0_i32 = arith.constant 0 : i32
    %c0_i32_0 = arith.constant 0 : i32
    %c0_i32_1 = arith.constant 0 : i32
    return %c0_i32, %c0_i32_0 : i32, i32
  }
  func.func @transform_3(%arg0: i32) -> (i32, i32) {
    %c0_i32 = arith.constant 0 : i32
    %c0_i32_0 = arith.constant 0 : i32
    %c0_i32_1 = arith.constant 0 : i32
    return %c0_i32, %c0_i32_0 : i32, i32
  }
  func.func @transform_4(%arg0: i32) -> (i32, i32) {
    %c0_i32 = arith.constant 0 : i32
    %c0_i32_0 = arith.constant 0 : i32
    %c0_i32_1 = arith.constant 0 : i32
    return %c0_i32, %c0_i32_0 : i32, i32
  }
  func.func @transform_5(%arg0: i32) -> (i32, i32) {
    %c0_i32 = arith.constant 0 : i32
    %c0_i32_0 = arith.constant 0 : i32
    %c0_i32_1 = arith.constant 0 : i32
    return %c0_i32, %c0_i32_0 : i32, i32
  }
  func.func @transform_6(%arg0: i32) -> (i32, i32) {
    %c0_i32 = arith.constant 0 : i32
    %c0_i32_0 = arith.constant 0 : i32
    %c0_i32_1 = arith.constant 0 : i32
    return %c0_i32, %c0_i32_0 : i32, i32
  }
  func.func @transform_7(%arg0: i32) -> (i32, i32) {
    %c0_i32 = arith.constant 0 : i32
    %c0_i32_0 = arith.constant 0 : i32
    return %arg0, %c0_i32 : i32, i32
  }
}

module attributes {stable_mosaic.version = 11 : i64} {
  func.func @_fused_mlp_kernel(%arg0: i32, %arg1: memref<8x128xf32, #tpu.memory_space<vmem>>, %arg2: memref<128x128xbf16, #tpu.memory_space<vmem>>, %arg3: memref<1x128xf32, #tpu.memory_space<vmem>>, %arg4: memref<128x128xbf16, #tpu.memory_space<vmem>>, %arg5: memref<1x128xf32, #tpu.memory_space<vmem>>, %arg6: memref<128x128xbf16, #tpu.memory_space<vmem>>, %arg7: memref<1x128xf32, #tpu.memory_space<vmem>>, %arg8: memref<8x128xf32, #tpu.memory_space<vmem>>) attributes {dimension_semantics = [#tpu.dimension_semantics<parallel>], iteration_bounds = array<i64: 1>, scalar_prefetch = 0 : i64, scratch_operands = 0 : i64, tpu.core_type = #tpu.core_type<tc>, window_params = [{transform_indices = @transform_0, window_bounds = array<i64: 8, 128>}, {pipeline_mode = #tpu.pipeline_mode<synchronous>, transform_indices = @transform_1, window_bounds = array<i64: 128, 128>}, {pipeline_mode = #tpu.pipeline_mode<synchronous>, transform_indices = @transform_2, window_bounds = array<i64: 1, 128>}, {pipeline_mode = #tpu.pipeline_mode<synchronous>, transform_indices = @transform_3, window_bounds = array<i64: 128, 128>}, {pipeline_mode = #tpu.pipeline_mode<synchronous>, transform_indices = @transform_4, window_bounds = array<i64: 1, 128>}, {pipeline_mode = #tpu.pipeline_mode<synchronous>, transform_indices = @transform_5, window_bounds = array<i64: 128, 128>}, {pipeline_mode = #tpu.pipeline_mode<synchronous>, transform_indices = @transform_6, window_bounds = array<i64: 1, 128>}, {transform_indices = @transform_7, window_bounds = array<i64: 8, 128>}]} {
    %c0 = arith.constant 0 : index
    %c0_0 = arith.constant 0 : index
    %0 = vector.load %arg1[%c0, %c0_0] : memref<8x128xf32, #tpu.memory_space<vmem>>, vector<8x128xf32>
    %1 = arith.truncf %0 : vector<8x128xf32> to vector<8x128xbf16>
    %c0_1 = arith.constant 0 : index
    %c0_2 = arith.constant 0 : index
    %2 = vector.load %arg2[%c0_1, %c0_2] : memref<128x128xbf16, #tpu.memory_space<vmem>>, vector<128x128xbf16>
    %cst = arith.constant dense<0.000000e+00> : vector<8x128xf32>
    %3 = tpu.matmul %1, %2, %cst {dimension_numbers = #tpu.dot_dimension_numbers<[1], [0], [0], [1], [0, 0, 1, 1], [], []>} : vector<8x128xbf16>, vector<128x128xbf16>, vector<8x128xf32> -> vector<8x128xf32>
    %c0_3 = arith.constant 0 : index
    %c0_4 = arith.constant 0 : index
    %4 = vector.load %arg3[%c0_3, %c0_4] : memref<1x128xf32, #tpu.memory_space<vmem>>, vector<1x128xf32>
    %5 = vector.broadcast %4 : vector<1x128xf32> to vector<8x128xf32>
    %6 = arith.addf %3, %5 : vector<8x128xf32>
    %cst_5 = arith.constant 0.000000e+00 : f32
    %7 = vector.broadcast %cst_5 : f32 to vector<8x128xf32>
    %8 = arith.maximumf %6, %7 : vector<8x128xf32>
    %9 = arith.truncf %8 : vector<8x128xf32> to vector<8x128xbf16>
    %c0_6 = arith.constant 0 : index
    %c0_7 = arith.constant 0 : index
    %10 = vector.load %arg4[%c0_6, %c0_7] : memref<128x128xbf16, #tpu.memory_space<vmem>>, vector<128x128xbf16>
    %cst_8 = arith.constant dense<0.000000e+00> : vector<8x128xf32>
    %11 = tpu.matmul %9, %10, %cst_8 {dimension_numbers = #tpu.dot_dimension_numbers<[1], [0], [0], [1], [0, 0, 1, 1], [], []>} : vector<8x128xbf16>, vector<128x128xbf16>, vector<8x128xf32> -> vector<8x128xf32>
    %c0_9 = arith.constant 0 : index
    %c0_10 = arith.constant 0 : index
    %12 = vector.load %arg5[%c0_9, %c0_10] : memref<1x128xf32, #tpu.memory_space<vmem>>, vector<1x128xf32>
    %13 = vector.broadcast %12 : vector<1x128xf32> to vector<8x128xf32>
    %14 = arith.addf %11, %13 : vector<8x128xf32>
    %cst_11 = arith.constant 0.000000e+00 : f32
    %15 = vector.broadcast %cst_11 : f32 to vector<8x128xf32>
    %16 = arith.maximumf %14, %15 : vector<8x128xf32>
    %17 = arith.truncf %16 : vector<8x128xf32> to vector<8x128xbf16>
    %c0_12 = arith.constant 0 : index
    %c0_13 = arith.constant 0 : index
    %18 = vector.load %arg6[%c0_12, %c0_13] : memref<128x128xbf16, #tpu.memory_space<vmem>>, vector<128x128xbf16>
    %cst_14 = arith.constant dense<0.000000e+00> : vector<8x128xf32>
    %19 = tpu.matmul %17, %18, %cst_14 {dimension_numbers = #tpu.dot_dimension_numbers<[1], [0], [0], [1], [0, 0, 1, 1], [], []>} : vector<8x128xbf16>, vector<128x128xbf16>, vector<8x128xf32> -> vector<8x128xf32>
    %c0_15 = arith.constant 0 : index
    %c0_16 = arith.constant 0 : index
    %20 = vector.load %arg7[%c0_15, %c0_16] : memref<1x128xf32, #tpu.memory_space<vmem>>, vector<1x128xf32>
    %21 = vector.broadcast %20 : vector<1x128xf32> to vector<8x128xf32>
    %22 = arith.addf %19, %21 : vector<8x128xf32>
    %c0_17 = arith.constant 0 : index
    %c0_18 = arith.constant 0 : index
    %23 = vector.load %arg8[%c0_17, %c0_18] : memref<8x128xf32, #tpu.memory_space<vmem>>, vector<8x128xf32>
    tpu.vector_store %arg8[%c0_17, %c0_18], %22 {strides = array<i32>} : memref<8x128xf32, #tpu.memory_space<vmem>>, vector<8x128xf32>,
    return
  }
  func.func @transform_0(%arg0: i32) -> (i32, i32) {
    %c0_i32 = arith.constant 0 : i32
    %c0_i32_0 = arith.constant 0 : i32
    return %arg0, %c0_i32 : i32, i32
  }
  func.func @transform_1(%arg0: i32) -> (i32, i32) {
    %c0_i32 = arith.constant 0 : i32
    %c0_i32_0 = arith.constant 0 : i32
    %c0_i32_1 = arith.constant 0 : i32
    return %c0_i32, %c0_i32_0 : i32, i32
  }
  func.func @transform_2(%arg0: i32) -> (i32, i32) {
    %c0_i32 = arith.constant 0 : i32
    %c0_i32_0 = arith.constant 0 : i32
    %c0_i32_1 = arith.constant 0 : i32
    return %c0_i32, %c0_i32_0 : i32, i32
  }
  func.func @transform_3(%arg0: i32) -> (i32, i32) {
    %c0_i32 = arith.constant 0 : i32
    %c0_i32_0 = arith.constant 0 : i32
    %c0_i32_1 = arith.constant 0 : i32
    return %c0_i32, %c0_i32_0 : i32, i32
  }
  func.func @transform_4(%arg0: i32) -> (i32, i32) {
    %c0_i32 = arith.constant 0 : i32
    %c0_i32_0 = arith.constant 0 : i32
    %c0_i32_1 = arith.constant 0 : i32
    return %c0_i32, %c0_i32_0 : i32, i32
  }
  func.func @transform_5(%arg0: i32) -> (i32, i32) {
    %c0_i32 = arith.constant 0 : i32
    %c0_i32_0 = arith.constant 0 : i32
    %c0_i32_1 = arith.constant 0 : i32
    return %c0_i32, %c0_i32_0 : i32, i32
  }
  func.func @transform_6(%arg0: i32) -> (i32, i32) {
    %c0_i32 = arith.constant 0 : i32
    %c0_i32_0 = arith.constant 0 : i32
    %c0_i32_1 = arith.constant 0 : i32
    return %c0_i32, %c0_i32_0 : i32, i32
  }
  func.func @transform_7(%arg0: i32) -> (i32, i32) {
    %c0_i32 = arith.constant 0 : i32
    %c0_i32_0 = arith.constant 0 : i32
    return %arg0, %c0_i32 : i32, i32
  }
}

</mosaic_0001>

<llo_original>
// kernel: mlp_forward.1
$region0: #{mlp_forward.1}
  #allocation0 [shape = 'u32[]', space=smem, size = 0x4, offset = 0x4, fixed_abs, tag = 'smem constant byte address 0x4 - core index']
  #allocation1 [shape = 'u32[144,128]{1,0:T(1,128)}', space=vmem, size = 0x12000, scoped, tag = 'internal scratch']
  %s0 = inlined_call_operand.vmem [shape: f32[8,128], index: 0, kind: input, shape index: {}]
  %s1 = inlined_call_operand.vmem [shape: bf16[128,128], index: 1, kind: input, shape index: {}]
  %s2 = inlined_call_operand.vmem [shape: f32[1,128], index: 2, kind: input, shape index: {}]
  %s3 = inlined_call_operand.vmem [shape: bf16[128,128], index: 3, kind: input, shape index: {}]
  %s4 = inlined_call_operand.vmem [shape: f32[1,128], index: 4, kind: input, shape index: {}]
  %s5 = inlined_call_operand.vmem [shape: bf16[128,128], index: 5, kind: input, shape index: {}]
  %s6 = inlined_call_operand.vmem [shape: f32[1,128], index: 6, kind: input, shape index: {}]
  %s7 = inlined_call_operand.vmem [shape: f32[8,128], index: 7, kind: output, shape index: {}]
  %s8 = sld [smem:[#allocation0]]
  $region38: #{mlp_forward.1} parent=0
    _
  %s10 = ssub.s32 1, %s8
  %s11 = scalar_select 0, %s10, %s8
  // Predicated region
  $region2: #{mlp_forward.1} parent=0 // pred_check
    _
  $region3: #{mlp_forward.1} parent=0 // pred_check_branch
    %13 = sbr.rel (0) target = $region5
  $region4: #{mlp_forward.1} parent=0 // pred_region
    _
  $region5: #{mlp_forward.1} parent=0 // pred_fallthru
    _
  // Predicated region
  $region6: #{mlp_forward.1} parent=0 // pred_check
    _
  $region7: #{mlp_forward.1} parent=0 // pred_check_branch
    %15 = sbr.rel (0) target = $region9
  $region8: #{mlp_forward.1} parent=0 // pred_region
    _
  $region9: #{mlp_forward.1} parent=0 // pred_fallthru
    _
  // Predicated region
  $region10: #{mlp_forward.1} parent=0 // pred_check
    _
  $region11: #{mlp_forward.1} parent=0 // pred_check_branch
    %17 = sbr.rel (0) target = $region13
  $region12: #{mlp_forward.1} parent=0 // pred_region
    _
  $region13: #{mlp_forward.1} parent=0 // pred_fallthru
    _
  // Predicated region
  $region14: #{mlp_forward.1} parent=0 // pred_check
    _
  $region15: #{mlp_forward.1} parent=0 // pred_check_branch
    %19 = sbr.rel (0) target = $region17
  $region16: #{mlp_forward.1} parent=0 // pred_region
    _
  $region17: #{mlp_forward.1} parent=0 // pred_fallthru
    _
  // Predicated region
  $region18: #{mlp_forward.1} parent=0 // pred_check
    _
  $region19: #{mlp_forward.1} parent=0 // pred_check_branch
    %21 = sbr.rel (0) target = $region21
  $region20: #{mlp_forward.1} parent=0 // pred_region
    _
  $region21: #{mlp_forward.1} parent=0 // pred_fallthru
    _
  // Predicated region
  $region22: #{mlp_forward.1} parent=0 // pred_check
    _
  $region23: #{mlp_forward.1} parent=0 // pred_check_branch
    %23 = sbr.rel (0) target = $region25
  $region24: #{mlp_forward.1} parent=0 // pred_region
    _
  $region25: #{mlp_forward.1} parent=0 // pred_fallthru
    _
  // Predicated region
  $region26: #{mlp_forward.1} parent=0 // pred_check
    _
  $region27: #{mlp_forward.1} parent=0 // pred_check_branch
    %25 = sbr.rel (0) target = $region29
  $region28: #{mlp_forward.1} parent=0 // pred_region
    _
  $region29: #{mlp_forward.1} parent=0 // pred_fallthru
    _
  %v27 = vld [vmem:[%s0] sm:$0xff]
  %v28 = vpack.c.bf16 %v27, %v27
  %v29 = vld [vmem:[%s1] sm:$0xf]
  %v30 = vld [vmem:[%s1 + $0x4] sm:$0xf]
  %v31 = vld [vmem:[%s1 + $0x8] sm:$0xf]
  %v32 = vld [vmem:[%s1 + $0xc] sm:$0xf]
  %v33 = vld [vmem:[%s1 + $0x10] sm:$0xf]
  %v34 = vld [vmem:[%s1 + $0x14] sm:$0xf]
  %v35 = vld [vmem:[%s1 + $0x18] sm:$0xf]
  %v36 = vld [vmem:[%s1 + $0x1c] sm:$0xf]
  %v37 = vld [vmem:[%s1 + $0x20] sm:$0xf]
  %v38 = vld [vmem:[%s1 + $0x24] sm:$0xf]
  %v39 = vld [vmem:[%s1 + $0x28] sm:$0xf]
  %v40 = vld [vmem:[%s1 + $0x2c] sm:$0xf]
  %v41 = vld [vmem:[%s1 + $0x30] sm:$0xf]
  %v42 = vld [vmem:[%s1 + $0x34] sm:$0xf]
  %v43 = vld [vmem:[%s1 + $0x38] sm:$0xf]
  %v44 = vld [vmem:[%s1 + $0x3c] sm:$0xf]
  %v45 = vld [vmem:[%s2] sm:$0x1]
  %v47 = vlaneseq
  %v48 = vshrl.u32 %v47, 7
  %v49 = vsub.s32 0, %v48
  %v50 = vrot.slane %v45, %v49
  %v68 = vunpack.c.l.b16 %v29
  %v69 = vunpack.c.l.b16 %v30
  %v70 = vunpack.c.l.b16 %v31
  %v71 = vunpack.c.l.b16 %v32
  %v72 = vunpack.c.l.b16 %v33
  %v73 = vunpack.c.l.b16 %v34
  %v74 = vunpack.c.l.b16 %v35
  %v75 = vunpack.c.l.b16 %v36
  %v76 = vunpack.c.l.b16 %v37
  %v77 = vunpack.c.l.b16 %v38
  %v78 = vunpack.c.l.b16 %v39
  %v79 = vunpack.c.l.b16 %v40
  %v80 = vunpack.c.l.b16 %v41
  %v81 = vunpack.c.l.b16 %v42
  %v82 = vunpack.c.l.b16 %v43
  %v83 = vunpack.c.l.b16 %v44
  %v84 = vpack.c.b16 %v69, %v68
  %v85 = vpack.c.b16 %v71, %v70
  %v86 = vpack.c.b16 %v73, %v72
  %v87 = vpack.c.b16 %v75, %v74
  %v88 = vpack.c.b16 %v77, %v76
  %v89 = vpack.c.b16 %v79, %v78
  %v90 = vpack.c.b16 %v81, %v80
  %v91 = vpack.c.b16 %v83, %v82
  %100 = vmatprep.subr.bf16.mxu0 0
  %101 = vmatpush1.bf16.msra.mxu0 %v84
  %102 = vmatprep.subr.bf16.mxu0 0
  %103 = vmatpush1.bf16.msra.mxu0 %v85
  %104 = vmatprep.subr.bf16.mxu0 0
  %105 = vmatpush1.bf16.msra.mxu0 %v86
  %106 = vmatprep.subr.bf16.mxu0 0
  %107 = vmatpush1.bf16.msra.mxu0 %v87
  %108 = vmatprep.subr.bf16.mxu0 0
  %109 = vmatpush1.bf16.msra.mxu0 %v88
  %110 = vmatprep.subr.bf16.mxu0 0
  %111 = vmatpush1.bf16.msra.mxu0 %v89
  %112 = vmatprep.subr.bf16.mxu0 0
  %113 = vmatpush1.bf16.msra.mxu0 %v90
  %114 = vmatprep.subr.bf16.mxu0 0
  %115 = vmatpush1.bf16.msra.mxu0 %v91
  %116 = vmatprep.subr.bf16.mxu0 0
  %117 = vmatpush1.bf16.msra.mxu0 0
  %118 = vmatprep.subr.bf16.mxu0 0
  %119 = vmatpush1.bf16.msra.mxu0 0
  %120 = vmatprep.subr.bf16.mxu0 0
  %121 = vmatpush1.bf16.msra.mxu0 0
  %122 = vmatprep.subr.bf16.mxu0 0
  %123 = vmatpush1.bf16.msra.mxu0 0
  %124 = vmatprep.subr.bf16.mxu0 0
  %125 = vmatpush1.bf16.msra.mxu0 0
  %126 = vmatprep.subr.bf16.mxu0 0
  %127 = vmatpush1.bf16.msra.mxu0 0
  %128 = vmatprep.subr.bf16.mxu0 0
  %129 = vmatpush1.bf16.msra.mxu0 0
  %130 = vmatprep.subr.bf16.mxu0 0
  %131 = vmatpush1.bf16.msra.mxu0 0
  %132 = vmatprep.mubr.bf16.mxu0 0
  %133 = vmatmul.mubr.bf16.gmra.mrb[0].mxu0 %v28
  %v134 = vpop.f32.mrb[0].mxu0
  %v135 = vadd.f32 %v50, %v134
  %v136 = vpop.f32.mrb[0].mxu0
  %v137 = vpop.f32.mrb[0].mxu0
  %v138 = vpop.f32.mrb[0].mxu0
  %139 = vdwg.mxu0
  %v140 = vmax.f32 %v135, 0.0
  %v141 = vpack.c.bf16 %v140, %v140
  %v142 = vld [vmem:[%s3] sm:$0xf]
  %v143 = vld [vmem:[%s3 + $0x4] sm:$0xf]
  %v144 = vld [vmem:[%s3 + $0x8] sm:$0xf]
  %v145 = vld [vmem:[%s3 + $0xc] sm:$0xf]
  %v146 = vld [vmem:[%s3 + $0x10] sm:$0xf]
  %v147 = vld [vmem:[%s3 + $0x14] sm:$0xf]
  %v148 = vld [vmem:[%s3 + $0x18] sm:$0xf]
  %v149 = vld [vmem:[%s3 + $0x1c] sm:$0xf]
  %v150 = vld [vmem:[%s3 + $0x20] sm:$0xf]
  %v151 = vld [vmem:[%s3 + $0x24] sm:$0xf]
  %v152 = vld [vmem:[%s3 + $0x28] sm:$0xf]
  %v153 = vld [vmem:[%s3 + $0x2c] sm:$0xf]
  %v154 = vld [vmem:[%s3 + $0x30] sm:$0xf]
  %v155 = vld [vmem:[%s3 + $0x34] sm:$0xf]
  %v156 = vld [vmem:[%s3 + $0x38] sm:$0xf]
  %v157 = vld [vmem:[%s3 + $0x3c] sm:$0xf]
  %v158 = vld [vmem:[%s4] sm:$0x1]
  %v160 = vlaneseq
  %v161 = vshrl.u32 %v160, 7
  %v162 = vsub.s32 0, %v161
  %v163 = vrot.slane %v158, %v162
  %v181 = vunpack.c.l.b16 %v142
  %v182 = vunpack.c.l.b16 %v143
  %v183 = vunpack.c.l.b16 %v144
  %v184 = vunpack.c.l.b16 %v145
  %v185 = vunpack.c.l.b16 %v146
  %v186 = vunpack.c.l.b16 %v147
  %v187 = vunpack.c.l.b16 %v148
  %v188 = vunpack.c.l.b16 %v149
  %v189 = vunpack.c.l.b16 %v150
  %v190 = vunpack.c.l.b16 %v151
  %v191 = vunpack.c.l.b16 %v152
  %v192 = vunpack.c.l.b16 %v153
  %v193 = vunpack.c.l.b16 %v154
  %v194 = vunpack.c.l.b16 %v155
  %v195 = vunpack.c.l.b16 %v156
  %v196 = vunpack.c.l.b16 %v157
  %v197 = vpack.c.b16 %v182, %v181
  %v198 = vpack.c.b16 %v184, %v183
  %v199 = vpack.c.b16 %v186, %v185
  %v200 = vpack.c.b16 %v188, %v187
  %v201 = vpack.c.b16 %v190, %v189
  %v202 = vpack.c.b16 %v192, %v191
  %v203 = vpack.c.b16 %v194, %v193
  %v204 = vpack.c.b16 %v196, %v195
  %213 = vmatprep.subr.bf16.mxu0 0
  %214 = vmatpush1.bf16.msra.mxu0 %v197
  %215 = vmatprep.subr.bf16.mxu0 0
  %216 = vmatpush1.bf16.msra.mxu0 %v198
  %217 = vmatprep.subr.bf16.mxu0 0
  %218 = vmatpush1.bf16.msra.mxu0 %v199
  %219 = vmatprep.subr.bf16.mxu0 0
  %220 = vmatpush1.bf16.msra.mxu0 %v200
  %221 = vmatprep.subr.bf16.mxu0 0
  %222 = vmatpush1.bf16.msra.mxu0 %v201
  %223 = vmatprep.subr.bf16.mxu0 0
  %224 = vmatpush1.bf16.msra.mxu0 %v202
  %225 = vmatprep.subr.bf16.mxu0 0
  %226 = vmatpush1.bf16.msra.mxu0 %v203
  %227 = vmatprep.subr.bf16.mxu0 0
  %228 = vmatpush1.bf16.msra.mxu0 %v204
  %229 = vmatprep.subr.bf16.mxu0 0
  %230 = vmatpush1.bf16.msra.mxu0 0
  %231 = vmatprep.subr.bf16.mxu0 0
  %232 = vmatpush1.bf16.msra.mxu0 0
  %233 = vmatprep.subr.bf16.mxu0 0
  %234 = vmatpush1.bf16.msra.mxu0 0
  %235 = vmatprep.subr.bf16.mxu0 0
  %236 = vmatpush1.bf16.msra.mxu0 0
  %237 = vmatprep.subr.bf16.mxu0 0
  %238 = vmatpush1.bf16.msra.mxu0 0
  %239 = vmatprep.subr.bf16.mxu0 0
  %240 = vmatpush1.bf16.msra.mxu0 0
  %241 = vmatprep.subr.bf16.mxu0 0
  %242 = vmatpush1.bf16.msra.mxu0 0
  %243 = vmatprep.subr.bf16.mxu0 0
  %244 = vmatpush1.bf16.msra.mxu0 0
  %245 = vmatprep.mubr.bf16.mxu0 0
  %246 = vmatmul.mubr.bf16.gmra.mrb[0].mxu0 %v141
  %v247 = vpop.f32.mrb[0].mxu0
  %v248 = vadd.f32 %v163, %v247
  %v249 = vpop.f32.mrb[0].mxu0
  %v250 = vpop.f32.mrb[0].mxu0
  %v251 = vpop.f32.mrb[0].mxu0
  %252 = vdwg.mxu0
  %v253 = vmax.f32 %v248, 0.0
  %v254 = vpack.c.bf16 %v253, %v253
  %v255 = vld [vmem:[%s5] sm:$0xf]
  %v256 = vld [vmem:[%s5 + $0x4] sm:$0xf]
  %v257 = vld [vmem:[%s5 + $0x8] sm:$0xf]
  %v258 = vld [vmem:[%s5 + $0xc] sm:$0xf]
  %v259 = vld [vmem:[%s5 + $0x10] sm:$0xf]
  %v260 = vld [vmem:[%s5 + $0x14] sm:$0xf]
  %v261 = vld [vmem:[%s5 + $0x18] sm:$0xf]
  %v262 = vld [vmem:[%s5 + $0x1c] sm:$0xf]
  %v263 = vld [vmem:[%s5 + $0x20] sm:$0xf]
  %v264 = vld [vmem:[%s5 + $0x24] sm:$0xf]
  %v265 = vld [vmem:[%s5 + $0x28] sm:$0xf]
  %v266 = vld [vmem:[%s5 + $0x2c] sm:$0xf]
  %v267 = vld [vmem:[%s5 + $0x30] sm:$0xf]
  %v268 = vld [vmem:[%s5 + $0x34] sm:$0xf]
  %v269 = vld [vmem:[%s5 + $0x38] sm:$0xf]
  %v270 = vld [vmem:[%s5 + $0x3c] sm:$0xf]
  %v271 = vld [vmem:[%s6] sm:$0x1]
  %v273 = vlaneseq
  %v274 = vshrl.u32 %v273, 7
  %v275 = vsub.s32 0, %v274
  %v276 = vrot.slane %v271, %v275
  %v294 = vunpack.c.l.b16 %v255
  %v295 = vunpack.c.l.b16 %v256
  %v296 = vunpack.c.l.b16 %v257
  %v297 = vunpack.c.l.b16 %v258
  %v298 = vunpack.c.l.b16 %v259
  %v299 = vunpack.c.l.b16 %v260
  %v300 = vunpack.c.l.b16 %v261
  %v301 = vunpack.c.l.b16 %v262
  %v302 = vunpack.c.l.b16 %v263
  %v303 = vunpack.c.l.b16 %v264
  %v304 = vunpack.c.l.b16 %v265
  %v305 = vunpack.c.l.b16 %v266
  %v306 = vunpack.c.l.b16 %v267
  %v307 = vunpack.c.l.b16 %v268
  %v308 = vunpack.c.l.b16 %v269
  %v309 = vunpack.c.l.b16 %v270
  %v310 = vpack.c.b16 %v295, %v294
  %v311 = vpack.c.b16 %v297, %v296
  %v312 = vpack.c.b16 %v299, %v298
  %v313 = vpack.c.b16 %v301, %v300
  %v314 = vpack.c.b16 %v303, %v302
  %v315 = vpack.c.b16 %v305, %v304
  %v316 = vpack.c.b16 %v307, %v306
  %v317 = vpack.c.b16 %v309, %v308
  %326 = vmatprep.subr.bf16.mxu0 0
  %327 = vmatpush1.bf16.msra.mxu0 %v310
  %328 = vmatprep.subr.bf16.mxu0 0
  %329 = vmatpush1.bf16.msra.mxu0 %v311
  %330 = vmatprep.subr.bf16.mxu0 0
  %331 = vmatpush1.bf16.msra.mxu0 %v312
  %332 = vmatprep.subr.bf16.mxu0 0
  %333 = vmatpush1.bf16.msra.mxu0 %v313
  %334 = vmatprep.subr.bf16.mxu0 0
  %335 = vmatpush1.bf16.msra.mxu0 %v314
  %336 = vmatprep.subr.bf16.mxu0 0
  %337 = vmatpush1.bf16.msra.mxu0 %v315
  %338 = vmatprep.subr.bf16.mxu0 0
  %339 = vmatpush1.bf16.msra.mxu0 %v316
  %340 = vmatprep.subr.bf16.mxu0 0
  %341 = vmatpush1.bf16.msra.mxu0 %v317
  %342 = vmatprep.subr.bf16.mxu0 0
  %343 = vmatpush1.bf16.msra.mxu0 0
  %344 = vmatprep.subr.bf16.mxu0 0
  %345 = vmatpush1.bf16.msra.mxu0 0
  %346 = vmatprep.subr.bf16.mxu0 0
  %347 = vmatpush1.bf16.msra.mxu0 0
  %348 = vmatprep.subr.bf16.mxu0 0
  %349 = vmatpush1.bf16.msra.mxu0 0
  %350 = vmatprep.subr.bf16.mxu0 0
  %351 = vmatpush1.bf16.msra.mxu0 0
  %352 = vmatprep.subr.bf16.mxu0 0
  %353 = vmatpush1.bf16.msra.mxu0 0
  %354 = vmatprep.subr.bf16.mxu0 0
  %355 = vmatpush1.bf16.msra.mxu0 0
  %356 = vmatprep.subr.bf16.mxu0 0
  %357 = vmatpush1.bf16.msra.mxu0 0
  %358 = vmatprep.mubr.bf16.mxu0 0
  %359 = vmatmul.mubr.bf16.gmra.mrb[0].mxu0 %v254
  %v360 = vpop.f32.mrb[0].mxu0
  %v361 = vadd.f32 %v276, %v360
  %v362 = vpop.f32.mrb[0].mxu0
  %v363 = vpop.f32.mrb[0].mxu0
  %v364 = vpop.f32.mrb[0].mxu0
  %365 = vdwg.mxu0
  %366 = vst [vmem:[%s7] sm:$0xff] %v361
  // Predicated region
  $region30: #{mlp_forward.1} parent=0 // pred_check
    _
  $region31: #{mlp_forward.1} parent=0 // pred_check_branch
    %368 = sbr.rel (0) target = $region33
  $region32: #{mlp_forward.1} parent=0 // pred_region
    _
  $region33: #{mlp_forward.1} parent=0 // pred_fallthru
    _
  // Predicated region
  $region34: #{mlp_forward.1} parent=0 // pred_check
    _
  $region35: #{mlp_forward.1} parent=0 // pred_check_branch
    %370 = sbr.rel (0) target = $region37
  $region36: #{mlp_forward.1} parent=0 // pred_region
    _
  $region37: #{mlp_forward.1} parent=0 // pred_fallthru
    _

// kernel: mlp_forward.1
$region0: #{mlp_forward.1}
  #allocation0 [shape = 'u32[]', space=smem, size = 0x4, offset = 0x4, fixed_abs, tag = 'smem constant byte address 0x4 - core index']
  #allocation1 [shape = 'u32[144,128]{1,0:T(1,128)}', space=vmem, size = 0x12000, scoped, tag = 'internal scratch']
  %s0 = inlined_call_operand.vmem [shape: f32[8,128], index: 0, kind: input, shape index: {}]
  %s1 = inlined_call_operand.vmem [shape: bf16[128,128], index: 1, kind: input, shape index: {}]
  %s2 = inlined_call_operand.vmem [shape: f32[1,128], index: 2, kind: input, shape index: {}]
  %s3 = inlined_call_operand.vmem [shape: bf16[128,128], index: 3, kind: input, shape index: {}]
  %s4 = inlined_call_operand.vmem [shape: f32[1,128], index: 4, kind: input, shape index: {}]
  %s5 = inlined_call_operand.vmem [shape: bf16[128,128], index: 5, kind: input, shape index: {}]
  %s6 = inlined_call_operand.vmem [shape: f32[1,128], index: 6, kind: input, shape index: {}]
  %s7 = inlined_call_operand.vmem [shape: f32[8,128], index: 7, kind: output, shape index: {}]
  %s8 = sld [smem:[#allocation0]]
  $region38: #{mlp_forward.1} parent=0
    _
  %s10 = ssub.s32 1, %s8
  %s11 = scalar_select 0, %s10, %s8
  // Predicated region
  $region2: #{mlp_forward.1} parent=0 // pred_check
    _
  $region3: #{mlp_forward.1} parent=0 // pred_check_branch
    %13 = sbr.rel (0) target = $region5
  $region4: #{mlp_forward.1} parent=0 // pred_region
    _
  $region5: #{mlp_forward.1} parent=0 // pred_fallthru
    _
  // Predicated region
  $region6: #{mlp_forward.1} parent=0 // pred_check
    _
  $region7: #{mlp_forward.1} parent=0 // pred_check_branch
    %15 = sbr.rel (0) target = $region9
  $region8: #{mlp_forward.1} parent=0 // pred_region
    _
  $region9: #{mlp_forward.1} parent=0 // pred_fallthru
    _
  // Predicated region
  $region10: #{mlp_forward.1} parent=0 // pred_check
    _
  $region11: #{mlp_forward.1} parent=0 // pred_check_branch
    %17 = sbr.rel (0) target = $region13
  $region12: #{mlp_forward.1} parent=0 // pred_region
    _
  $region13: #{mlp_forward.1} parent=0 // pred_fallthru
    _
  // Predicated region
  $region14: #{mlp_forward.1} parent=0 // pred_check
    _
  $region15: #{mlp_forward.1} parent=0 // pred_check_branch
    %19 = sbr.rel (0) target = $region17
  $region16: #{mlp_forward.1} parent=0 // pred_region
    _
  $region17: #{mlp_forward.1} parent=0 // pred_fallthru
    _
  // Predicated region
  $region18: #{mlp_forward.1} parent=0 // pred_check
    _
  $region19: #{mlp_forward.1} parent=0 // pred_check_branch
    %21 = sbr.rel (0) target = $region21
  $region20: #{mlp_forward.1} parent=0 // pred_region
    _
  $region21: #{mlp_forward.1} parent=0 // pred_fallthru
    _
  // Predicated region
  $region22: #{mlp_forward.1} parent=0 // pred_check
    _
  $region23: #{mlp_forward.1} parent=0 // pred_check_branch
    %23 = sbr.rel (0) target = $region25
  $region24: #{mlp_forward.1} parent=0 // pred_region
    _
  $region25: #{mlp_forward.1} parent=0 // pred_fallthru
    _
  // Predicated region
  $region26: #{mlp_forward.1} parent=0 // pred_check
    _
  $region27: #{mlp_forward.1} parent=0 // pred_check_branch
    %25 = sbr.rel (0) target = $region29
  $region28: #{mlp_forward.1} parent=0 // pred_region
    _
  $region29: #{mlp_forward.1} parent=0 // pred_fallthru
    _
  %v27 = vld [vmem:[%s0] sm:$0xff]
  %v28 = vpack.c.bf16 %v27, %v27
  %v29 = vld [vmem:[%s1] sm:$0xf]
  %v30 = vld [vmem:[%s1 + $0x4] sm:$0xf]
  %v31 = vld [vmem:[%s1 + $0x8] sm:$0xf]
  %v32 = vld [vmem:[%s1 + $0xc] sm:$0xf]
  %v33 = vld [vmem:[%s1 + $0x10] sm:$0xf]
  %v34 = vld [vmem:[%s1 + $0x14] sm:$0xf]
  %v35 = vld [vmem:[%s1 + $0x18] sm:$0xf]
  %v36 = vld [vmem:[%s1 + $0x1c] sm:$0xf]
  %v37 = vld [vmem:[%s1 + $0x20] sm:$0xf]
  %v38 = vld [vmem:[%s1 + $0x24] sm:$0xf]
  %v39 = vld [vmem:[%s1 + $0x28] sm:$0xf]
  %v40 = vld [vmem:[%s1 + $0x2c] sm:$0xf]
  %v41 = vld [vmem:[%s1 + $0x30] sm:$0xf]
  %v42 = vld [vmem:[%s1 + $0x34] sm:$0xf]
  %v43 = vld [vmem:[%s1 + $0x38] sm:$0xf]
  %v44 = vld [vmem:[%s1 + $0x3c] sm:$0xf]
  %v45 = vld [vmem:[%s2] sm:$0x1]
  %v47 = vlaneseq
  %v48 = vshrl.u32 %v47, 7
  %v49 = vsub.s32 0, %v48
  %v50 = vrot.slane %v45, %v49
  %v68 = vunpack.c.l.b16 %v29
  %v69 = vunpack.c.l.b16 %v30
  %v70 = vunpack.c.l.b16 %v31
  %v71 = vunpack.c.l.b16 %v32
  %v72 = vunpack.c.l.b16 %v33
  %v73 = vunpack.c.l.b16 %v34
  %v74 = vunpack.c.l.b16 %v35
  %v75 = vunpack.c.l.b16 %v36
  %v76 = vunpack.c.l.b16 %v37
  %v77 = vunpack.c.l.b16 %v38
  %v78 = vunpack.c.l.b16 %v39
  %v79 = vunpack.c.l.b16 %v40
  %v80 = vunpack.c.l.b16 %v41
  %v81 = vunpack.c.l.b16 %v42
  %v82 = vunpack.c.l.b16 %v43
  %v83 = vunpack.c.l.b16 %v44
  %v84 = vpack.c.b16 %v69, %v68
  %v85 = vpack.c.b16 %v71, %v70
  %v86 = vpack.c.b16 %v73, %v72
  %v87 = vpack.c.b16 %v75, %v74
  %v88 = vpack.c.b16 %v77, %v76
  %v89 = vpack.c.b16 %v79, %v78
  %v90 = vpack.c.b16 %v81, %v80
  %v91 = vpack.c.b16 %v83, %v82
  %100 = vmatprep.subr.bf16.mxu0 0
  %101 = vmatpush1.bf16.msra.mxu0 %v84
  %102 = vmatprep.subr.bf16.mxu0 0
  %103 = vmatpush1.bf16.msra.mxu0 %v85
  %104 = vmatprep.subr.bf16.mxu0 0
  %105 = vmatpush1.bf16.msra.mxu0 %v86
  %106 = vmatprep.subr.bf16.mxu0 0
  %107 = vmatpush1.bf16.msra.mxu0 %v87
  %108 = vmatprep.subr.bf16.mxu0 0
  %109 = vmatpush1.bf16.msra.mxu0 %v88
  %110 = vmatprep.subr.bf16.mxu0 0
  %111 = vmatpush1.bf16.msra.mxu0 %v89
  %112 = vmatprep.subr.bf16.mxu0 0
  %113 = vmatpush1.bf16.msra.mxu0 %v90
  %114 = vmatprep.subr.bf16.mxu0 0
  %115 = vmatpush1.bf16.msra.mxu0 %v91
  %116 = vmatprep.subr.bf16.mxu0 0
  %117 = vmatpush1.bf16.msra.mxu0 0
  %118 = vmatprep.subr.bf16.mxu0 0
  %119 = vmatpush1.bf16.msra.mxu0 0
  %120 = vmatprep.subr.bf16.mxu0 0
  %121 = vmatpush1.bf16.msra.mxu0 0
  %122 = vmatprep.subr.bf16.mxu0 0
  %123 = vmatpush1.bf16.msra.mxu0 0
  %124 = vmatprep.subr.bf16.mxu0 0
  %125 = vmatpush1.bf16.msra.mxu0 0
  %126 = vmatprep.subr.bf16.mxu0 0
  %127 = vmatpush1.bf16.msra.mxu0 0
  %128 = vmatprep.subr.bf16.mxu0 0
  %129 = vmatpush1.bf16.msra.mxu0 0
  %130 = vmatprep.subr.bf16.mxu0 0
  %131 = vmatpush1.bf16.msra.mxu0 0
  %132 = vmatprep.mubr.bf16.mxu0 0
  %133 = vmatmul.mubr.bf16.gmra.mrb[0].mxu0 %v28
  %v134 = vpop.f32.mrb[0].mxu0
  %v135 = vadd.f32 %v50, %v134
  %v136 = vpop.f32.mrb[0].mxu0
  %v137 = vpop.f32.mrb[0].mxu0
  %v138 = vpop.f32.mrb[0].mxu0
  %139 = vdwg.mxu0
  %v140 = vmax.f32 %v135, 0.0
  %v141 = vpack.c.bf16 %v140, %v140
  %v142 = vld [vmem:[%s3] sm:$0xf]
  %v143 = vld [vmem:[%s3 + $0x4] sm:$0xf]
  %v144 = vld [vmem:[%s3 + $0x8] sm:$0xf]
  %v145 = vld [vmem:[%s3 + $0xc] sm:$0xf]
  %v146 = vld [vmem:[%s3 + $0x10] sm:$0xf]
  %v147 = vld [vmem:[%s3 + $0x14] sm:$0xf]
  %v148 = vld [vmem:[%s3 + $0x18] sm:$0xf]
  %v149 = vld [vmem:[%s3 + $0x1c] sm:$0xf]
  %v150 = vld [vmem:[%s3 + $0x20] sm:$0xf]
  %v151 = vld [vmem:[%s3 + $0x24] sm:$0xf]
  %v152 = vld [vmem:[%s3 + $0x28] sm:$0xf]
  %v153 = vld [vmem:[%s3 + $0x2c] sm:$0xf]
  %v154 = vld [vmem:[%s3 + $0x30] sm:$0xf]
  %v155 = vld [vmem:[%s3 + $0x34] sm:$0xf]
  %v156 = vld [vmem:[%s3 + $0x38] sm:$0xf]
  %v157 = vld [vmem:[%s3 + $0x3c] sm:$0xf]
  %v158 = vld [vmem:[%s4] sm:$0x1]
  %v160 = vlaneseq
  %v161 = vshrl.u32 %v160, 7
  %v162 = vsub.s32 0, %v161
  %v163 = vrot.slane %v158, %v162
  %v181 = vunpack.c.l.b16 %v142
  %v182 = vunpack.c.l.b16 %v143
  %v183 = vunpack.c.l.b16 %v144
  %v184 = vunpack.c.l.b16 %v145
  %v185 = vunpack.c.l.b16 %v146
  %v186 = vunpack.c.l.b16 %v147
  %v187 = vunpack.c.l.b16 %v148
  %v188 = vunpack.c.l.b16 %v149
  %v189 = vunpack.c.l.b16 %v150
  %v190 = vunpack.c.l.b16 %v151
  %v191 = vunpack.c.l.b16 %v152
  %v192 = vunpack.c.l.b16 %v153
  %v193 = vunpack.c.l.b16 %v154
  %v194 = vunpack.c.l.b16 %v155
  %v195 = vunpack.c.l.b16 %v156
  %v196 = vunpack.c.l.b16 %v157
  %v197 = vpack.c.b16 %v182, %v181
  %v198 = vpack.c.b16 %v184, %v183
  %v199 = vpack.c.b16 %v186, %v185
  %v200 = vpack.c.b16 %v188, %v187
  %v201 = vpack.c.b16 %v190, %v189
  %v202 = vpack.c.b16 %v192, %v191
  %v203 = vpack.c.b16 %v194, %v193
  %v204 = vpack.c.b16 %v196, %v195
  %213 = vmatprep.subr.bf16.mxu0 0
  %214 = vmatpush1.bf16.msra.mxu0 %v197
  %215 = vmatprep.subr.bf16.mxu0 0
  %216 = vmatpush1.bf16.msra.mxu0 %v198
  %217 = vmatprep.subr.bf16.mxu0 0
  %218 = vmatpush1.bf16.msra.mxu0 %v199
  %219 = vmatprep.subr.bf16.mxu0 0
  %220 = vmatpush1.bf16.msra.mxu0 %v200
  %221 = vmatprep.subr.bf16.mxu0 0
  %222 = vmatpush1.bf16.msra.mxu0 %v201
  %223 = vmatprep.subr.bf16.mxu0 0
  %224 = vmatpush1.bf16.msra.mxu0 %v202
  %225 = vmatprep.subr.bf16.mxu0 0
  %226 = vmatpush1.bf16.msra.mxu0 %v203
  %227 = vmatprep.subr.bf16.mxu0 0
  %228 = vmatpush1.bf16.msra.mxu0 %v204
  %229 = vmatprep.subr.bf16.mxu0 0
  %230 = vmatpush1.bf16.msra.mxu0 0
  %231 = vmatprep.subr.bf16.mxu0 0
  %232 = vmatpush1.bf16.msra.mxu0 0
  %233 = vmatprep.subr.bf16.mxu0 0
  %234 = vmatpush1.bf16.msra.mxu0 0
  %235 = vmatprep.subr.bf16.mxu0 0
  %236 = vmatpush1.bf16.msra.mxu0 0
  %237 = vmatprep.subr.bf16.mxu0 0
  %238 = vmatpush1.bf16.msra.mxu0 0
  %239 = vmatprep.subr.bf16.mxu0 0
  %240 = vmatpush1.bf16.msra.mxu0 0
  %241 = vmatprep.subr.bf16.mxu0 0
  %242 = vmatpush1.bf16.msra.mxu0 0
  %243 = vmatprep.subr.bf16.mxu0 0
  %244 = vmatpush1.bf16.msra.mxu0 0
  %245 = vmatprep.mubr.bf16.mxu0 0
  %246 = vmatmul.mubr.bf16.gmra.mrb[0].mxu0 %v141
  %v247 = vpop.f32.mrb[0].mxu0
  %v248 = vadd.f32 %v163, %v247
  %v249 = vpop.f32.mrb[0].mxu0
  %v250 = vpop.f32.mrb[0].mxu0
  %v251 = vpop.f32.mrb[0].mxu0
  %252 = vdwg.mxu0
  %v253 = vmax.f32 %v248, 0.0
  %v254 = vpack.c.bf16 %v253, %v253
  %v255 = vld [vmem:[%s5] sm:$0xf]
  %v256 = vld [vmem:[%s5 + $0x4] sm:$0xf]
  %v257 = vld [vmem:[%s5 + $0x8] sm:$0xf]
  %v258 = vld [vmem:[%s5 + $0xc] sm:$0xf]
  %v259 = vld [vmem:[%s5 + $0x10] sm:$0xf]
  %v260 = vld [vmem:[%s5 + $0x14] sm:$0xf]
  %v261 = vld [vmem:[%s5 + $0x18] sm:$0xf]
  %v262 = vld [vmem:[%s5 + $0x1c] sm:$0xf]
  %v263 = vld [vmem:[%s5 + $0x20] sm:$0xf]
  %v264 = vld [vmem:[%s5 + $0x24] sm:$0xf]
  %v265 = vld [vmem:[%s5 + $0x28] sm:$0xf]
  %v266 = vld [vmem:[%s5 + $0x2c] sm:$0xf]
  %v267 = vld [vmem:[%s5 + $0x30] sm:$0xf]
  %v268 = vld [vmem:[%s5 + $0x34] sm:$0xf]
  %v269 = vld [vmem:[%s5 + $0x38] sm:$0xf]
  %v270 = vld [vmem:[%s5 + $0x3c] sm:$0xf]
  %v271 = vld [vmem:[%s6] sm:$0x1]
  %v273 = vlaneseq
  %v274 = vshrl.u32 %v273, 7
  %v275 = vsub.s32 0, %v274
  %v276 = vrot.slane %v271, %v275
  %v294 = vunpack.c.l.b16 %v255
  %v295 = vunpack.c.l.b16 %v256
  %v296 = vunpack.c.l.b16 %v257
  %v297 = vunpack.c.l.b16 %v258
  %v298 = vunpack.c.l.b16 %v259
  %v299 = vunpack.c.l.b16 %v260
  %v300 = vunpack.c.l.b16 %v261
  %v301 = vunpack.c.l.b16 %v262
  %v302 = vunpack.c.l.b16 %v263
  %v303 = vunpack.c.l.b16 %v264
  %v304 = vunpack.c.l.b16 %v265
  %v305 = vunpack.c.l.b16 %v266
  %v306 = vunpack.c.l.b16 %v267
  %v307 = vunpack.c.l.b16 %v268
  %v308 = vunpack.c.l.b16 %v269
  %v309 = vunpack.c.l.b16 %v270
  %v310 = vpack.c.b16 %v295, %v294
  %v311 = vpack.c.b16 %v297, %v296
  %v312 = vpack.c.b16 %v299, %v298
  %v313 = vpack.c.b16 %v301, %v300
  %v314 = vpack.c.b16 %v303, %v302
  %v315 = vpack.c.b16 %v305, %v304
  %v316 = vpack.c.b16 %v307, %v306
  %v317 = vpack.c.b16 %v309, %v308
  %326 = vmatprep.subr.bf16.mxu0 0
  %327 = vmatpush1.bf16.msra.mxu0 %v310
  %328 = vmatprep.subr.bf16.mxu0 0
  %329 = vmatpush1.bf16.msra.mxu0 %v311
  %330 = vmatprep.subr.bf16.mxu0 0
  %331 = vmatpush1.bf16.msra.mxu0 %v312
  %332 = vmatprep.subr.bf16.mxu0 0
  %333 = vmatpush1.bf16.msra.mxu0 %v313
  %334 = vmatprep.subr.bf16.mxu0 0
  %335 = vmatpush1.bf16.msra.mxu0 %v314
  %336 = vmatprep.subr.bf16.mxu0 0
  %337 = vmatpush1.bf16.msra.mxu0 %v315
  %338 = vmatprep.subr.bf16.mxu0 0
  %339 = vmatpush1.bf16.msra.mxu0 %v316
  %340 = vmatprep.subr.bf16.mxu0 0
  %341 = vmatpush1.bf16.msra.mxu0 %v317
  %342 = vmatprep.subr.bf16.mxu0 0
  %343 = vmatpush1.bf16.msra.mxu0 0
  %344 = vmatprep.subr.bf16.mxu0 0
  %345 = vmatpush1.bf16.msra.mxu0 0
  %346 = vmatprep.subr.bf16.mxu0 0
  %347 = vmatpush1.bf16.msra.mxu0 0
  %348 = vmatprep.subr.bf16.mxu0 0
  %349 = vmatpush1.bf16.msra.mxu0 0
  %350 = vmatprep.subr.bf16.mxu0 0
  %351 = vmatpush1.bf16.msra.mxu0 0
  %352 = vmatprep.subr.bf16.mxu0 0
  %353 = vmatpush1.bf16.msra.mxu0 0
  %354 = vmatprep.subr.bf16.mxu0 0
  %355 = vmatpush1.bf16.msra.mxu0 0
  %356 = vmatprep.subr.bf16.mxu0 0
  %357 = vmatpush1.bf16.msra.mxu0 0
  %358 = vmatprep.mubr.bf16.mxu0 0
  %359 = vmatmul.mubr.bf16.gmra.mrb[0].mxu0 %v254
  %v360 = vpop.f32.mrb[0].mxu0
  %v361 = vadd.f32 %v276, %v360
  %v362 = vpop.f32.mrb[0].mxu0
  %v363 = vpop.f32.mrb[0].mxu0
  %v364 = vpop.f32.mrb[0].mxu0
  %365 = vdwg.mxu0
  %366 = vst [vmem:[%s7] sm:$0xff] %v361
  // Predicated region
  $region30: #{mlp_forward.1} parent=0 // pred_check
    _
  $region31: #{mlp_forward.1} parent=0 // pred_check_branch
    %368 = sbr.rel (0) target = $region33
  $region32: #{mlp_forward.1} parent=0 // pred_region
    _
  $region33: #{mlp_forward.1} parent=0 // pred_fallthru
    _
  // Predicated region
  $region34: #{mlp_forward.1} parent=0 // pred_check
    _
  $region35: #{mlp_forward.1} parent=0 // pred_check_branch
    %370 = sbr.rel (0) target = $region37
  $region36: #{mlp_forward.1} parent=0 // pred_region
    _
  $region37: #{mlp_forward.1} parent=0 // pred_fallthru
    _

</llo_original>
